<compile_context>
chip_gen: v7x
topology: tpu7x:2x2x1
jax: 0.10.0
libtpu: 0.0.40
codegen_flags: <defaults>
</compile_context>

<pallas_src>
import jax
import jax.numpy as jnp
from jax.experimental import pallas as pl
from jax.experimental.pallas import tpu as pltpu

_LANE = 128                     # f32 lane width of a vreg
_SUBLANE = 8                    # f32 sublane count
_TARGET_TILE_BYTES = 4 << 20    # ~4 MiB of VMEM per (double-buffered) x tile
_MIN_PALLAS_BYTES = 1 << 20     # below this, skip pallas_call entirely


def _round_up(n: int, m: int) -> int:
    return ((n + m - 1) // m) * m


def _pick_rows(total_rows: int, vmem_row_bytes: int) -> int:
    """Rows per batch tile: ~4 MiB VMEM/buffer, multiple of 8, >= 2 grid steps."""
    bt = max(_SUBLANE, (_TARGET_TILE_BYTES // vmem_row_bytes) // _SUBLANE * _SUBLANE)
    bt = min(bt, _round_up(total_rows, _SUBLANE))
    # Keep at least two grid steps so the "parallel" batch axis can be split
    # across v7x's two TensorCores (neutral on single-TC v5e/v6e).
    if total_rows > _SUBLANE and pl.cdiv(total_rows, bt) < 2:
        bt = max(_SUBLANE, _round_up(pl.cdiv(total_rows, 2), _SUBLANE))
    return bt


# --------------------------------------------------------------- kernels ----

def _rowdot_kernel(x_ref, w_ref, b_ref, o_ref):
    # x_ref: (bt, D) VMEM  w_ref: (1, D) VMEM (resident)  b_ref: (1,) SMEM
    # o_ref: (bt, 1) VMEM.  Used when rows are already lane-dense (D >= 128)
    # or when the lane-dense repack does not apply.
    prod = x_ref[...] * w_ref[...]                       # VPU (1, D) broadcast
    s = jnp.sum(prod, axis=-1, keepdims=True)            # XLU lane reduce
    o_ref[...] = (s + b_ref[0]).astype(o_ref.dtype)      # SMEM scalar bias


def _packed_kernel(xp_ref, wbd_ref, b_ref, o_ref):
    # xp_ref: (btp, 128) lane-dense packed rows (128//D original rows per packed
    # row), wbd_ref: (128, r) block-diagonal weight (resident), b_ref: (1,) SMEM,
    # o_ref: (btp, r).  The per-row dot products ride the otherwise-idle MXU.
    acc = jnp.dot(xp_ref[...], wbd_ref[...],
                  preferred_element_type=jnp.float32,
                  precision=jax.lax.Precision.HIGHEST)
    o_ref[...] = (acc + b_ref[0]).astype(o_ref.dtype)


# --------------------------------------------------------------- wrapper ----

def linear_forward(x, w, b, *, force_pallas: bool = False):
    """y = x @ w.T + b for nn.Linear(D, 1): x (B, D), w (1, D), b (1,) -> (B, 1)."""
    B, D = x.shape
    O, D2 = w.shape
    assert D == D2 and O == 1, "LinearRegressionModel has output_size = 1"

    # Tiny-input fast path: launch/DMA-setup overhead dominates; let XLA fuse it.
    if not force_pallas and B * D * x.dtype.itemsize < _MIN_PALLAS_BYTES:
        return x @ w.T + b

    smem_bias = pl.BlockSpec(memory_space=pltpu.MemorySpace.SMEM)
    cparams = pltpu.CompilerParams(
        dimension_semantics=("parallel",),   # batch tiles are independent
        vmem_limit_bytes=32 << 20,           # covers worst-case ~18 MiB on v5e too
    )

    r = _LANE // D if (D < _LANE and _LANE % D == 0) else 0
    use_packed = (r > 1) and (B % r == 0) and (x.dtype == jnp.float32)

    if use_packed:
        # Lane-dense repack: r = 128//D original rows per packed 128-lane row;
        # reduce on the MXU with a (128, r) block-diagonal copy of w.
        n_packed = B // r
        xp = x.reshape(n_packed, _LANE)
        wbd = jnp.kron(jnp.eye(r, dtype=w.dtype), w.reshape(D, 1))     # (128, r)
        btp = _pick_rows(n_packed, _LANE * 4)
        grid = (pl.cdiv(n_packed, btp),)
        out = pl.pallas_call(
            _packed_kernel,
            out_shape=jax.ShapeDtypeStruct((n_packed, r), x.dtype),
            grid_spec=pltpu.PrefetchScalarGridSpec(
                num_scalar_prefetch=0,
                grid=grid,
                in_specs=[
                    pl.BlockSpec((btp, _LANE), lambda i: (i, 0)),   # packed x tile
                    pl.BlockSpec((_LANE, r), lambda i: (0, 0)),     # resident weight
                    smem_bias,
                ],
                out_specs=pl.BlockSpec((btp, r), lambda i: (i, 0)),
            ),
            compiler_params=cparams,
        )(xp, wbd, b)
        return out.reshape(B, 1)

    # Row-dot path: D >= 128, D not a divisor of 128, or B not packable.
    vmem_row_bytes = _round_up(D, _LANE) * x.dtype.itemsize   # lane-padded VMEM row
    bt = _pick_rows(B, vmem_row_bytes)
    grid = (pl.cdiv(B, bt),)          # no pad: Pallas masks the ragged last block
    return pl.pallas_call(
        _rowdot_kernel,
        out_shape=jax.ShapeDtypeStruct((B, 1), x.dtype),
        grid_spec=pltpu.PrefetchScalarGridSpec(
            num_scalar_prefetch=0,
            grid=grid,
            in_specs=[
                pl.BlockSpec((bt, D), lambda i: (i, 0)),   # x row tile
                pl.BlockSpec((1, D), lambda i: (0, 0)),    # resident weight row
                smem_bias,
            ],
            out_specs=pl.BlockSpec((bt, 1), lambda i: (i, 0)),
        ),
        compiler_params=cparams,
    )(x, w, b)


if __name__ == "__main__":
    key = jax.random.PRNGKey(0)
    kx, kw, kb = jax.random.split(key, 3)

    input_size = 32     # stands in for X_train.shape[1]
    output_size = 1

    # Deterministic "parameter init" mimicking nn.Linear defaults
    # (uniform in [-1/sqrt(fan_in), 1/sqrt(fan_in)]).
    bound = 1.0 / jnp.sqrt(jnp.float32(input_size))
    w = jax.random.uniform(kw, (output_size, input_size),
                           minval=-bound, maxval=bound, dtype=jnp.float32)
    b = jax.random.uniform(kb, (output_size,),
                           minval=-bound, maxval=bound, dtype=jnp.float32)

    ok = True

    # Case 1: B divisible by 128//D -> lane-dense packed (MXU) path, 2-step grid.
    x1 = jax.random.normal(kx, (256, input_size), dtype=jnp.float32)
    y1 = linear_forward(x1, w, b, force_pallas=True)
    jax.block_until_ready(y1)
    ref1 = x1 @ w.T + b
    ok &= (y1.shape == (256, output_size)) and bool(
        jnp.allclose(y1, ref1, atol=1e-4, rtol=1e-4))

    # Case 2: ragged batch -> row-dot (VPU+XLU) path with a partial last block.
    x2 = jax.random.normal(jax.random.fold_in(kx, 1), (250, input_size),
                           dtype=jnp.float32)
    y2 = linear_forward(x2, w, b, force_pallas=True)
    jax.block_until_ready(y2)
    ref2 = x2 @ w.T + b
    ok &= (y2.shape == (250, output_size)) and bool(
        jnp.allclose(y2, ref2, atol=1e-5, rtol=1e-5))

    # Case 3: tiny-input fast path (plain XLA fallback).
    x3 = jax.random.normal(jax.random.fold_in(kx, 2), (8, input_size),
                           dtype=jnp.float32)
    y3 = linear_forward(x3, w, b)
    jax.block_until_ready(y3)
    ok &= bool(jnp.allclose(y3, x3 @ w.T + b, atol=1e-5, rtol=1e-5))

    if not ok:
        raise SystemExit("mismatch vs reference")
    print("KERNEL_OK")
</pallas_src>

<mosaic_0001>
module attributes {stable_mosaic.version = 11 : i64} {
  func.func @_packed_kernel(%arg0: i32, %arg1: memref<32x128xf32, #tpu.memory_space<vmem>>, %arg2: memref<128x4xf32, #tpu.memory_space<vmem>>, %arg3: memref<1xf32, #tpu.memory_space<smem>>, %arg4: memref<32x4xf32, #tpu.memory_space<vmem>>) attributes {dimension_semantics = [#tpu.dimension_semantics<parallel>], iteration_bounds = array<i64: 2>, scalar_prefetch = 0 : i64, scratch_operands = 0 : i64, tpu.core_type = #tpu.core_type<tc>, window_params = [{transform_indices = @transform_0, window_bounds = array<i64: 32, 128>}, {pipeline_mode = #tpu.pipeline_mode<synchronous>, transform_indices = @transform_1, window_bounds = array<i64: 128, 4>}, {transform_indices = @transform_2, window_bounds = array<i64: 1>}, {transform_indices = @transform_3, window_bounds = array<i64: 32, 4>}]} {
    %c0 = arith.constant 0 : index
    %c0_0 = arith.constant 0 : index
    %0 = vector.load %arg1[%c0, %c0_0] : memref<32x128xf32, #tpu.memory_space<vmem>>, vector<32x128xf32>
    %c0_1 = arith.constant 0 : index
    %c0_2 = arith.constant 0 : index
    %1 = vector.load %arg2[%c0_1, %c0_2] : memref<128x4xf32, #tpu.memory_space<vmem>>, vector<128x4xf32>
    %cst = arith.constant dense<0.000000e+00> : vector<32x4xf32>
    %2 = tpu.matmul %0, %1, %cst {dimension_numbers = #tpu.dot_dimension_numbers<[1], [0], [0], [1], [0, 0, 1, 1], [], []>, precision = #tpu.contract_precision<fp32>} : vector<32x128xf32>, vector<128x4xf32>, vector<32x4xf32> -> vector<32x4xf32>
    %c0_3 = arith.constant 0 : index
    %3 = memref.load %arg3[%c0_3] : memref<1xf32, #tpu.memory_space<smem>>
    %4 = vector.broadcast %3 : f32 to vector<32x4xf32>
    %5 = arith.addf %2, %4 : vector<32x4xf32>
    %c0_4 = arith.constant 0 : index
    %c0_5 = arith.constant 0 : index
    %6 = vector.load %arg4[%c0_4, %c0_5] : memref<32x4xf32, #tpu.memory_space<vmem>>, vector<32x4xf32>
    tpu.vector_store %arg4[%c0_4, %c0_5], %5 {strides = array<i32>} : memref<32x4xf32, #tpu.memory_space<vmem>>, vector<32x4xf32>,
    return
  }
  func.func @transform_0(%arg0: i32) -> (i32, i32) {
    %c0_i32 = arith.constant 0 : i32
    %c0_i32_0 = arith.constant 0 : i32
    return %arg0, %c0_i32 : i32, i32
  }
  func.func @transform_1(%arg0: i32) -> (i32, i32) {
    %c0_i32 = arith.constant 0 : i32
    %c0_i32_0 = arith.constant 0 : i32
    %c0_i32_1 = arith.constant 0 : i32
    return %c0_i32, %c0_i32_0 : i32, i32
  }
  func.func @transform_2(%arg0: i32) -> i32 {
    %c0_i32 = arith.constant 0 : i32
    %c0_i32_0 = arith.constant 0 : i32
    return %c0_i32 : i32
  }
  func.func @transform_3(%arg0: i32) -> (i32, i32) {
    %c0_i32 = arith.constant 0 : i32
    %c0_i32_0 = arith.constant 0 : i32
    return %arg0, %c0_i32 : i32, i32
  }
}

</mosaic_0001>

<llo_original>
// kernel: tpu_custom_call.1
$region0: #{tpu_custom_call.1}
  #allocation0 [shape = 'u32[]', space=smem, size = 0x4, offset = 0x4, fixed_abs, tag = 'smem constant byte address 0x4 - core index']
  #allocation1 [shape = 'u32[144,128]{1,0:T(1,128)}', space=vmem, size = 0x12000, scoped, tag = 'internal scratch']
  #allocation2 [shape = 'f32[1]{0:T(128)S(6)}', space=smem, size = 0x200, scoped, tag = 'scoped memory for tpu_custom_call.1']
  %s0 = inlined_call_operand.vmem [shape: f32[64,128], index: 0, kind: input, shape index: {}]
  %s1 = inlined_call_operand.vmem [shape: f32[128,4], index: 1, kind: input, shape index: {}]
  %s2 = inlined_call_operand.<no memory space> [shape: f32[1], index: 2, kind: input, shape index: {}]
  %s3 = inlined_call_operand.vmem [shape: f32[64,4], index: 3, kind: output, shape index: {}]
  %s4 = sld [smem:[#allocation0]]
  $region45: #{tpu_custom_call.1} parent=0
    _
  %s6 = ssub.s32 1, %s4
  %s7 = scalar_select 0, %s6, %s4
  %8 = sst [smem:[#allocation2]] %s2
  loop: start=0, step=1, limit=4
  $region2: #{tpu_custom_call.1} parent=0 // loop_pre_header
    _
  $region3: #{tpu_custom_call.1} parent=0 // loop_header
    %s10 = sphi 0, %s14
    %p11 = scmp.ge.s32.totalorder %s10, 4
    %s20 = sphi 0, %s22
    %s23 = sphi 0, %s20
    %s24 = sphi 0, %s23
    %s40 = sphi 0, %s24
    %s44 = sphi 0, %s44
    %s46 = sphi 0, %s44
    %s47 = sphi 0, %s46
    %s61 = sphi 0, %s47
    %s65 = sphi 0, %s65
    %s67 = sphi 0, %s65
    %s68 = sphi 0, %s67
    %s82 = sphi 0, %s68
    %s88 = sphi 0, %s90
    %s91 = sphi 0, %s88
    %s92 = sphi 0, %s91
    %s108 = sphi 0, %s92
  $region4: #{tpu_custom_call.1} parent=0 // loop_header_branch
    %13 = sbr.rel (%p11) target = $region8
  $region5: #{tpu_custom_call.1} parent=0 // loop_body
    %s15 = ssub.s32 %s10, 1
    %s16 = ssub.s32 %s10, 2
    %s17 = sadd.s32 %s10, 1
    %s18 = ssub.s32 %s10, %s17
    %p19 = scmp.eq.s32.totalorder %s18, 0
    %s21 = sadd.s32 %s20, 1
    %s22 = scalar_select %p19, %s20, %s21
    %p25 = pneg %p19
    %p26 = scmp.eq.s32.totalorder %s10, 1
    %p27 = por %p25, %p26
    %p28 = scmp.ne.s32.totalorder %s20, %s23
    %p29 = scmp.eq.s32.totalorder %s10, 0
    %p30 = por %p28, %p29
    %p31 = scmp.ne.s32.totalorder %s20, %s23
    %p32 = scmp.eq.s32.totalorder %s15, 1
    %p33 = por %p31, %p32
    %p34 = scmp.ne.s32.totalorder %s23, %s24
    %p35 = scmp.eq.s32.totalorder %s15, 0
    %p36 = por %p34, %p35
    %p37 = scmp.ne.s32.totalorder %s23, %s24
    %p38 = scmp.eq.s32.totalorder %s16, 1
    %p39 = por %p37, %p38
    %p41 = scmp.ne.s32.totalorder %s24, %s40
    %p42 = scmp.eq.s32.totalorder %s16, 0
    %p43 = por %p41, %p42
    %s45 = sadd.s32 %s44, 1
    %p48 = scmp.eq.s32.totalorder %s10, 1
    %p49 = scmp.ne.s32.totalorder %s44, %s46
    %p50 = scmp.eq.s32.totalorder %s10, 0
    %p51 = por %p49, %p50
    %p52 = scmp.ne.s32.totalorder %s44, %s46
    %p53 = scmp.eq.s32.totalorder %s15, 1
    %p54 = por %p52, %p53
    %p55 = scmp.ne.s32.totalorder %s46, %s47
    %p56 = scmp.eq.s32.totalorder %s15, 0
    %p57 = por %p55, %p56
    %p58 = scmp.ne.s32.totalorder %s46, %s47
    %p59 = scmp.eq.s32.totalorder %s16, 1
    %p60 = por %p58, %p59
    %p62 = scmp.ne.s32.totalorder %s47, %s61
    %p63 = scmp.eq.s32.totalorder %s16, 0
    %p64 = por %p62, %p63
    %s66 = sadd.s32 %s65, 1
    %p69 = scmp.eq.s32.totalorder %s10, 1
    %p70 = scmp.ne.s32.totalorder %s65, %s67
    %p71 = scmp.eq.s32.totalorder %s10, 0
    %p72 = por %p70, %p71
    %p73 = scmp.ne.s32.totalorder %s65, %s67
    %p74 = scmp.eq.s32.totalorder %s15, 1
    %p75 = por %p73, %p74
    %p76 = scmp.ne.s32.totalorder %s67, %s68
    %p77 = scmp.eq.s32.totalorder %s15, 0
    %p78 = por %p76, %p77
    %p79 = scmp.ne.s32.totalorder %s67, %s68
    %p80 = scmp.eq.s32.totalorder %s16, 1
    %p81 = por %p79, %p80
    %p83 = scmp.ne.s32.totalorder %s68, %s82
    %p84 = scmp.eq.s32.totalorder %s16, 0
    %p85 = por %p83, %p84
    %s86 = ssub.s32 %s10, %s17
    %p87 = scmp.eq.s32.totalorder %s86, 0
    %s89 = sadd.s32 %s88, 1
    %s90 = scalar_select %p87, %s88, %s89
    %p93 = pneg %p87
    %p94 = scmp.eq.s32.totalorder %s10, 1
    %p95 = por %p93, %p94
    %p96 = scmp.ne.s32.totalorder %s88, %s91
    %p97 = scmp.eq.s32.totalorder %s10, 0
    %p98 = por %p96, %p97
    %p99 = scmp.ne.s32.totalorder %s88, %s91
    %p100 = scmp.eq.s32.totalorder %s15, 1
    %p101 = por %p99, %p100
    %p102 = scmp.ne.s32.totalorder %s91, %s92
    %p103 = scmp.eq.s32.totalorder %s15, 0
    %p104 = por %p102, %p103
    %p105 = scmp.ne.s32.totalorder %s91, %s92
    %p106 = scmp.eq.s32.totalorder %s16, 1
    %p107 = por %p105, %p106
    %p109 = scmp.ne.s32.totalorder %s92, %s108
    %p110 = scmp.eq.s32.totalorder %s16, 0
    %p111 = por %p109, %p110
    %p112 = scmp.le.s32.totalorder 1, %s10
    %p113 = scmp.lt.s32.totalorder %s10, 3
    %p114 = pnand %p112, %p113
    %p115 = pneg %p114
    // Predicated region
    $region9: #{tpu_custom_call.1} parent=5 // pred_check
      _
    $region10: #{tpu_custom_call.1} parent=5 // pred_check_branch
      %117 = sbr.rel (%p114) target = $region12
    $region11: #{tpu_custom_call.1} parent=5 // pred_region
      %s118 = ssub.s32 %s10, 1
      // Predicated region
      $region13: #{tpu_custom_call.1} parent=11 // pred_check
        %p119 = pneg %p57
      $region14: #{tpu_custom_call.1} parent=11 // pred_check_branch
        %121 = sbr.rel (%p119) target = $region16
      $region15: #{tpu_custom_call.1} parent=11 // pred_region
        _
      $region16: #{tpu_custom_call.1} parent=11 // pred_fallthru
        _
      // Predicated region
      $region17: #{tpu_custom_call.1} parent=11 // pred_check
        %p122 = pneg %p78
      $region18: #{tpu_custom_call.1} parent=11 // pred_check_branch
        %124 = sbr.rel (%p122) target = $region20
      $region19: #{tpu_custom_call.1} parent=11 // pred_region
        _
      $region20: #{tpu_custom_call.1} parent=11 // pred_fallthru
        _
    $region12: #{tpu_custom_call.1} parent=5 // pred_fallthru
      _
    %p125 = scmp.lt.s32.totalorder %s10, 2
    // Predicated region
    $region21: #{tpu_custom_call.1} parent=5 // pred_check
      %p126 = pneg %p125
    $region22: #{tpu_custom_call.1} parent=5 // pred_check_branch
      %128 = sbr.rel (%p126) target = $region24
    $region23: #{tpu_custom_call.1} parent=5 // pred_region
      // Predicated region
      $region25: #{tpu_custom_call.1} parent=23 // pred_check
        %p129 = pneg %p30
      $region26: #{tpu_custom_call.1} parent=23 // pred_check_branch
        %131 = sbr.rel (%p129) target = $region28
      $region27: #{tpu_custom_call.1} parent=23 // pred_region
        %s132 = smul.u32 4, %s10
        %p133 = scmp.lt.s32.totalorder %s132, 7
        %s134 = scalar_select %p133, %s132, 7
        %s135 = smul.addr %s134, 8
        %s136 = scalar_lea.vmem %s0, %s135
        %s137 = smul.u32 4, %s10
      $region28: #{tpu_custom_call.1} parent=23 // pred_fallthru
        _
    $region24: #{tpu_custom_call.1} parent=5 // pred_fallthru
      _
    %p138 = scmp.le.s32.totalorder 1, %s10
    %p139 = scmp.lt.s32.totalorder %s10, 3
    %p140 = pnand %p138, %p139
    %p141 = pneg %p140
    // Predicated region
    $region29: #{tpu_custom_call.1} parent=5 // pred_check
      _
    $region30: #{tpu_custom_call.1} parent=5 // pred_check_branch
      %143 = sbr.rel (%p140) target = $region32
    $region31: #{tpu_custom_call.1} parent=5 // pred_region
      %s144 = ssub.s32 %s10, 1
      %s145 = smul.u32 4, %s15
      %p146 = scmp.lt.s32.totalorder %s145, 7
      %s147 = scalar_select %p146, %s145, 7
      %s148 = smul.addr %s147, 8
      %s149 = scalar_lea.vmem %s0, %s148
      %p150 = pneg %p36
      %p151 = pneg %p33
      %p152 = pneg %p57
      %p153 = pneg %p54
      %p154 = pneg %p78
      %p155 = pneg %p75
      %p156 = pneg %p104
      %p157 = pneg %p101
      %s158 = smul.u32 4, %s15
      %p159 = scmp.lt.s32.totalorder %s158, 7
      %s160 = scalar_select %p159, %s158, 7
      %s161 = smul.addr %s160, 8
      %s162 = scalar_lea.vmem %s3, %s161
      %s163 = smul.u32 4, %s15
      %p164 = scmp.lt.s32.totalorder %s163, 7
      %s165 = scalar_select %p164, %s163, 7
      %s166 = smul.addr %s165, 8
      %s167 = scalar_lea.vmem %s0, %s166
      %s168 = smul.u32 4, %s15
      %s169 = smul.u32 4, %s15
      %p170 = scmp.lt.s32.totalorder %s169, 7
      %s171 = scalar_select %p170, %s169, 7
      %s172 = smul.addr %s171, 8
      %s173 = scalar_lea.vmem %s3, %s172
      %s174 = smul.u32 4, %s15
      %v175 = vld [vmem:[%s167] sm:$0xff]
      %v176 = vld [vmem:[%s167 + $0x8] sm:$0xff]
      %v177 = vld [vmem:[%s167 + $0x10] sm:$0xff]
      %v178 = vld [vmem:[%s167 + $0x18] sm:$0xff]
      %v179 = vld [vmem:[%s1] sm:$0xff]
      %v180 = vld [vmem:[%s1 + $0x8] sm:$0xff]
      %v181 = vld [vmem:[%s1 + $0x10] sm:$0xff]
      %v182 = vld [vmem:[%s1 + $0x18] sm:$0xff]
      %v183 = vld [vmem:[%s1 + $0x20] sm:$0xff]
      %v184 = vld [vmem:[%s1 + $0x28] sm:$0xff]
      %v185 = vld [vmem:[%s1 + $0x30] sm:$0xff]
      %v186 = vld [vmem:[%s1 + $0x38] sm:$0xff]
      %v187 = vld [vmem:[%s1 + $0x40] sm:$0xff]
      %v188 = vld [vmem:[%s1 + $0x48] sm:$0xff]
      %v189 = vld [vmem:[%s1 + $0x50] sm:$0xff]
      %v190 = vld [vmem:[%s1 + $0x58] sm:$0xff]
      %v191 = vld [vmem:[%s1 + $0x60] sm:$0xff]
      %v192 = vld [vmem:[%s1 + $0x68] sm:$0xff]
      %v193 = vld [vmem:[%s1 + $0x70] sm:$0xff]
      %v194 = vld [vmem:[%s1 + $0x78] sm:$0xff]
      %s195 = sld [smem:[#allocation2]]
      %v196 = vstv %s195
      %197 = vmatprep.subr.mxu0 0.0
      %v198 = vand.u32 %v179, 4294901760
      %199 = vmatpush1.msra.mxu0 %v198
      %200 = vmatprep.subr.mxu0 0.0
      %v201 = vand.u32 %v180, 4294901760
      %202 = vmatpush1.msra.mxu0 %v201
      %203 = vmatprep.subr.mxu0 0.0
      %v204 = vand.u32 %v181, 4294901760
      %205 = vmatpush1.msra.mxu0 %v204
      %206 = vmatprep.subr.mxu0 0.0
      %v207 = vand.u32 %v182, 4294901760
      %208 = vmatpush1.msra.mxu0 %v207
      %209 = vmatprep.subr.mxu0 0.0
      %v210 = vand.u32 %v183, 4294901760
      %211 = vmatpush1.msra.mxu0 %v210
      %212 = vmatprep.subr.mxu0 0.0
      %v213 = vand.u32 %v184, 4294901760
      %214 = vmatpush1.msra.mxu0 %v213
      %215 = vmatprep.subr.mxu0 0.0
      %v216 = vand.u32 %v185, 4294901760
      %217 = vmatpush1.msra.mxu0 %v216
      %218 = vmatprep.subr.mxu0 0.0
      %v219 = vand.u32 %v186, 4294901760
      %220 = vmatpush1.msra.mxu0 %v219
      %221 = vmatprep.subr.mxu0 0.0
      %v222 = vand.u32 %v187, 4294901760
      %223 = vmatpush1.msra.mxu0 %v222
      %224 = vmatprep.subr.mxu0 0.0
      %v225 = vand.u32 %v188, 4294901760
      %226 = vmatpush1.msra.mxu0 %v225
      %227 = vmatprep.subr.mxu0 0.0
      %v228 = vand.u32 %v189, 4294901760
      %229 = vmatpush1.msra.mxu0 %v228
      %230 = vmatprep.subr.mxu0 0.0
      %v231 = vand.u32 %v190, 4294901760
      %232 = vmatpush1.msra.mxu0 %v231
      %233 = vmatprep.subr.mxu0 0.0
      %v234 = vand.u32 %v191, 4294901760
      %235 = vmatpush1.msra.mxu0 %v234
      %236 = vmatprep.subr.mxu0 0.0
      %v237 = vand.u32 %v192, 4294901760
      %238 = vmatpush1.msra.mxu0 %v237
      %239 = vmatprep.subr.mxu0 0.0
      %v240 = vand.u32 %v193, 4294901760
      %241 = vmatpush1.msra.mxu0 %v240
      %242 = vmatprep.subr.mxu0 0.0
      %v243 = vand.u32 %v194, 4294901760
      %244 = vmatpush1.msra.mxu0 %v243
      %245 = vmatprep.subr.mxu0 0.0
      %246 = vmatpush1.msra.mxu0 0.0
      %247 = vmatprep.subr.mxu0 0.0
      %248 = vmatpush1.msra.mxu0 0.0
      %249 = vmatprep.subr.mxu0 0.0
      %250 = vmatpush1.msra.mxu0 0.0
      %251 = vmatprep.subr.mxu0 0.0
      %252 = vmatpush1.msra.mxu0 0.0
      %253 = vmatprep.subr.mxu0 0.0
      %254 = vmatpush1.msra.mxu0 0.0
      %255 = vmatprep.subr.mxu0 0.0
      %256 = vmatpush1.msra.mxu0 0.0
      %257 = vmatprep.subr.mxu0 0.0
      %258 = vmatpush1.msra.mxu0 0.0
      %259 = vmatprep.subr.mxu0 0.0
      %260 = vmatpush1.msra.mxu0 0.0
      %261 = vmatprep.subr.mxu0 0.0
      %262 = vmatpush1.msra.mxu0 0.0
      %263 = vmatprep.subr.mxu0 0.0
      %264 = vmatpush1.msra.mxu0 0.0
      %265 = vmatprep.subr.mxu0 0.0
      %266 = vmatpush1.msra.mxu0 0.0
      %267 = vmatprep.subr.mxu0 0.0
      %268 = vmatpush1.msra.mxu0 0.0
      %269 = vmatprep.subr.mxu0 0.0
      %270 = vmatpush1.msra.mxu0 0.0
      %271 = vmatprep.subr.mxu0 0.0
      %272 = vmatpush1.msra.mxu0 0.0
      %273 = vmatprep.subr.mxu0 0.0
      %274 = vmatpush1.msra.mxu0 0.0
      %275 = vmatprep.subr.mxu0 0.0
      %276 = vmatpush1.msra.mxu0 0.0
      %277 = vmatprep.mubr.f32.mxu0 0.0
      %v278 = vand.u32 %v175, 4294901760
      %v279 = vsub.f32 %v175, %v278
      %v280 = vand.u32 %v279, 4294901760
      %v281 = vsub.f32 %v279, %v280
      %v282 = vand.u32 %v281, 4294901760
      %283 = vmatmul.mubr.f32.gmra.mrb[0].mxu0 %v282
      %v284 = vpop.f32.mrb[0].mxu0
      %v285 = vadd.f32 %v196, %v284
      %v286 = vpop.f32.mrb[0].mxu0
      %287 = vmatprep.mubr.f32.mxu0 0.0
      %v288 = vand.u32 %v176, 4294901760
      %v289 = vsub.f32 %v176, %v288
      %v290 = vand.u32 %v289, 4294901760
      %v291 = vsub.f32 %v289, %v290
      %v292 = vand.u32 %v291, 4294901760
      %293 = vmatmul.mubr.f32.gmra.mrb[0].mxu0 %v292
      %v294 = vpop.f32.mrb[0].mxu0
      %v295 = vadd.f32 %v196, %v294
      %v296 = vpop.f32.mrb[0].mxu0
      %297 = vmatprep.mubr.f32.mxu0 0.0
      %v298 = vand.u32 %v177, 4294901760
      %v299 = vsub.f32 %v177, %v298
      %v300 = vand.u32 %v299, 4294901760
      %v301 = vsub.f32 %v299, %v300
      %v302 = vand.u32 %v301, 4294901760
      %303 = vmatmul.mubr.f32.gmra.mrb[0].mxu0 %v302
      %v304 = vpop.f32.mrb[0].mxu0
      %v305 = vadd.f32 %v196, %v304
      %v306 = vpop.f32.mrb[0].mxu0
      %307 = vmatprep.mubr.f32.mxu0 0.0
      %v308 = vand.u32 %v178, 4294901760
      %v309 = vsub.f32 %v178, %v308
      %v310 = vand.u32 %v309, 4294901760
      %v311 = vsub.f32 %v309, %v310
      %v312 = vand.u32 %v311, 4294901760
      %313 = vmatmul.mubr.f32.gmra.mrb[0].mxu0 %v312
      %v314 = vpop.f32.mrb[0].mxu0
      %v315 = vadd.f32 %v196, %v314
      %v316 = vpop.f32.mrb[0].mxu0
      %317 = vdwg.mxu0
      %318 = vmatprep.subr.mxu0 0.0
      %v319 = vand.u32 %v179, 4294901760
      %v320 = vsub.f32 %v179, %v319
      %v321 = vand.u32 %v320, 4294901760
      %v322 = vsub.f32 %v320, %v321
      %v323 = vand.u32 %v322, 4294901760
      %324 = vmatpush1.msra.mxu0 %v323
      %325 = vmatprep.subr.mxu0 0.0
      %v326 = vand.u32 %v180, 4294901760
      %v327 = vsub.f32 %v180, %v326
      %v328 = vand.u32 %v327, 4294901760
      %v329 = vsub.f32 %v327, %v328
      %v330 = vand.u32 %v329, 4294901760
      %331 = vmatpush1.msra.mxu0 %v330
      %332 = vmatprep.subr.mxu0 0.0
      %v333 = vand.u32 %v181, 4294901760
      %v334 = vsub.f32 %v181, %v333
      %v335 = vand.u32 %v334, 4294901760
      %v336 = vsub.f32 %v334, %v335
      %v337 = vand.u32 %v336, 4294901760
      %338 = vmatpush1.msra.mxu0 %v337
      %339 = vmatprep.subr.mxu0 0.0
      %v340 = vand.u32 %v182, 4294901760
      %v341 = vsub.f32 %v182, %v340
      %v342 = vand.u32 %v341, 4294901760
      %v343 = vsub.f32 %v341, %v342
      %v344 = vand.u32 %v343, 4294901760
      %345 = vmatpush1.msra.mxu0 %v344
      %346 = vmatprep.subr.mxu0 0.0
      %v347 = vand.u32 %v183, 4294901760
      %v348 = vsub.f32 %v183, %v347
      %v349 = vand.u32 %v348, 4294901760
      %v350 = vsub.f32 %v348, %v349
      %v351 = vand.u32 %v350, 4294901760
      %352 = vmatpush1.msra.mxu0 %v351
      %353 = vmatprep.subr.mxu0 0.0
      %v354 = vand.u32 %v184, 4294901760
      %v355 = vsub.f32 %v184, %v354
      %v356 = vand.u32 %v355, 4294901760
      %v357 = vsub.f32 %v355, %v356
      %v358 = vand.u32 %v357, 4294901760
      %359 = vmatpush1.msra.mxu0 %v358
      %360 = vmatprep.subr.mxu0 0.0
      %v361 = vand.u32 %v185, 4294901760
      %v362 = vsub.f32 %v185, %v361
      %v363 = vand.u32 %v362, 4294901760
      %v364 = vsub.f32 %v362, %v363
      %v365 = vand.u32 %v364, 4294901760
      %366 = vmatpush1.msra.mxu0 %v365
      %367 = vmatprep.subr.mxu0 0.0
      %v368 = vand.u32 %v186, 4294901760
      %v369 = vsub.f32 %v186, %v368
      %v370 = vand.u32 %v369, 4294901760
      %v371 = vsub.f32 %v369, %v370
      %v372 = vand.u32 %v371, 4294901760
      %373 = vmatpush1.msra.mxu0 %v372
      %374 = vmatprep.subr.mxu0 0.0
      %v375 = vand.u32 %v187, 4294901760
      %v376 = vsub.f32 %v187, %v375
      %v377 = vand.u32 %v376, 4294901760
      %v378 = vsub.f32 %v376, %v377
      %v379 = vand.u32 %v378, 4294901760
      %380 = vmatpush1.msra.mxu0 %v379
      %381 = vmatprep.subr.mxu0 0.0
      %v382 = vand.u32 %v188, 4294901760
      %v383 = vsub.f32 %v188, %v382
      %v384 = vand.u32 %v383, 4294901760
      %v385 = vsub.f32 %v383, %v384
      %v386 = vand.u32 %v385, 4294901760
      %387 = vmatpush1.msra.mxu0 %v386
      %388 = vmatprep.subr.mxu0 0.0
      %v389 = vand.u32 %v189, 4294901760
      %v390 = vsub.f32 %v189, %v389
      %v391 = vand.u32 %v390, 4294901760
      %v392 = vsub.f32 %v390, %v391
      %v393 = vand.u32 %v392, 4294901760
      %394 = vmatpush1.msra.mxu0 %v393
      %395 = vmatprep.subr.mxu0 0.0
      %v396 = vand.u32 %v190, 4294901760
      %v397 = vsub.f32 %v190, %v396
      %v398 = vand.u32 %v397, 4294901760
      %v399 = vsub.f32 %v397, %v398
      %v400 = vand.u32 %v399, 4294901760
      %401 = vmatpush1.msra.mxu0 %v400
      %402 = vmatprep.subr.mxu0 0.0
      %v403 = vand.u32 %v191, 4294901760
      %v404 = vsub.f32 %v191, %v403
      %v405 = vand.u32 %v404, 4294901760
      %v406 = vsub.f32 %v404, %v405
      %v407 = vand.u32 %v406, 4294901760
      %408 = vmatpush1.msra.mxu0 %v407
      %409 = vmatprep.subr.mxu0 0.0
      %v410 = vand.u32 %v192, 4294901760
      %v411 = vsub.f32 %v192, %v410
      %v412 = vand.u32 %v411, 4294901760
      %v413 = vsub.f32 %v411, %v412
      %v414 = vand.u32 %v413, 4294901760
      %415 = vmatpush1.msra.mxu0 %v414
      %416 = vmatprep.subr.mxu0 0.0
      %v417 = vand.u32 %v193, 4294901760
      %v418 = vsub.f32 %v193, %v417
      %v419 = vand.u32 %v418, 4294901760
      %v420 = vsub.f32 %v418, %v419
      %v421 = vand.u32 %v420, 4294901760
      %422 = vmatpush1.msra.mxu0 %v421
      %423 = vmatprep.subr.mxu0 0.0
      %v424 = vand.u32 %v194, 4294901760
      %v425 = vsub.f32 %v194, %v424
      %v426 = vand.u32 %v425, 4294901760
      %v427 = vsub.f32 %v425, %v426
      %v428 = vand.u32 %v427, 4294901760
      %429 = vmatpush1.msra.mxu0 %v428
      %430 = vmatprep.subr.mxu0 0.0
      %431 = vmatpush1.msra.mxu0 0.0
      %432 = vmatprep.subr.mxu0 0.0
      %433 = vmatpush1.msra.mxu0 0.0
      %434 = vmatprep.subr.mxu0 0.0
      %435 = vmatpush1.msra.mxu0 0.0
      %436 = vmatprep.subr.mxu0 0.0
      %437 = vmatpush1.msra.mxu0 0.0
      %438 = vmatprep.subr.mxu0 0.0
      %439 = vmatpush1.msra.mxu0 0.0
      %440 = vmatprep.subr.mxu0 0.0
      %441 = vmatpush1.msra.mxu0 0.0
      %442 = vmatprep.subr.mxu0 0.0
      %443 = vmatpush1.msra.mxu0 0.0
      %444 = vmatprep.subr.mxu0 0.0
      %445 = vmatpush1.msra.mxu0 0.0
      %446 = vmatprep.subr.mxu0 0.0
      %447 = vmatpush1.msra.mxu0 0.0
      %448 = vmatprep.subr.mxu0 0.0
      %449 = vmatpush1.msra.mxu0 0.0
      %450 = vmatprep.subr.mxu0 0.0
      %451 = vmatpush1.msra.mxu0 0.0
      %452 = vmatprep.subr.mxu0 0.0
      %453 = vmatpush1.msra.mxu0 0.0
      %454 = vmatprep.subr.mxu0 0.0
      %455 = vmatpush1.msra.mxu0 0.0
      %456 = vmatprep.subr.mxu0 0.0
      %457 = vmatpush1.msra.mxu0 0.0
      %458 = vmatprep.subr.mxu0 0.0
      %459 = vmatpush1.msra.mxu0 0.0
      %460 = vmatprep.subr.mxu0 0.0
      %461 = vmatpush1.msra.mxu0 0.0
      %462 = vmatprep.mubr.f32.mxu0 0.0
      %v463 = vand.u32 %v175, 4294901760
      %464 = vmatmul.mubr.f32.gmra.mrb[0].mxu0 %v463
      %v465 = vpop.f32.mrb[0].mxu0
      %v466 = vadd.f32 %v285, %v465
      %v467 = vpop.f32.mrb[0].mxu0
      %468 = vmatprep.mubr.f32.mxu0 0.0
      %v469 = vand.u32 %v176, 4294901760
      %470 = vmatmul.mubr.f32.gmra.mrb[0].mxu0 %v469
      %v471 = vpop.f32.mrb[0].mxu0
      %v472 = vadd.f32 %v295, %v471
      %v473 = vpop.f32.mrb[0].mxu0
      %474 = vmatprep.mubr.f32.mxu0 0.0
      %v475 = vand.u32 %v177, 4294901760
      %476 = vmatmul.mubr.f32.gmra.mrb[0].mxu0 %v475
      %v477 = vpop.f32.mrb[0].mxu0
      %v478 = vadd.f32 %v305, %v477
      %v479 = vpop.f32.mrb[0].mxu0
      %480 = vmatprep.mubr.f32.mxu0 0.0
      %v481 = vand.u32 %v178, 4294901760
      %482 = vmatmul.mubr.f32.gmra.mrb[0].mxu0 %v481
      %v483 = vpop.f32.mrb[0].mxu0
      %v484 = vadd.f32 %v315, %v483
      %v485 = vpop.f32.mrb[0].mxu0
      %486 = vdwg.mxu0
      %487 = vmatprep.subr.mxu0 0.0
      %v488 = vand.u32 %v179, 4294901760
      %v489 = vsub.f32 %v179, %v488
      %490 = vmatpush1.msra.mxu0 %v489
      %491 = vmatprep.subr.mxu0 0.0
      %v492 = vand.u32 %v180, 4294901760
      %v493 = vsub.f32 %v180, %v492
      %494 = vmatpush1.msra.mxu0 %v493
      %495 = vmatprep.subr.mxu0 0.0
      %v496 = vand.u32 %v181, 4294901760
      %v497 = vsub.f32 %v181, %v496
      %498 = vmatpush1.msra.mxu0 %v497
      %499 = vmatprep.subr.mxu0 0.0
      %v500 = vand.u32 %v182, 4294901760
      %v501 = vsub.f32 %v182, %v500
      %502 = vmatpush1.msra.mxu0 %v501
      %503 = vmatprep.subr.mxu0 0.0
      %v504 = vand.u32 %v183, 4294901760
      %v505 = vsub.f32 %v183, %v504
      %506 = vmatpush1.msra.mxu0 %v505
      %507 = vmatprep.subr.mxu0 0.0
      %v508 = vand.u32 %v184, 4294901760
      %v509 = vsub.f32 %v184, %v508
      %510 = vmatpush1.msra.mxu0 %v509
      %511 = vmatprep.subr.mxu0 0.0
      %v512 = vand.u32 %v185, 4294901760
      %v513 = vsub.f32 %v185, %v512
      %514 = vmatpush1.msra.mxu0 %v513
      %515 = vmatprep.subr.mxu0 0.0
      %v516 = vand.u32 %v186, 4294901760
      %v517 = vsub.f32 %v186, %v516
      %518 = vmatpush1.msra.mxu0 %v517
      %519 = vmatprep.subr.mxu0 0.0
      %v520 = vand.u32 %v187, 4294901760
      %v521 = vsub.f32 %v187, %v520
      %522 = vmatpush1.msra.mxu0 %v521
      %523 = vmatprep.subr.mxu0 0.0
      %v524 = vand.u32 %v188, 4294901760
      %v525 = vsub.f32 %v188, %v524
      %526 = vmatpush1.msra.mxu0 %v525
      %527 = vmatprep.subr.mxu0 0.0
      %v528 = vand.u32 %v189, 4294901760
      %v529 = vsub.f32 %v189, %v528
      %530 = vmatpush1.msra.mxu0 %v529
      %531 = vmatprep.subr.mxu0 0.0
      %v532 = vand.u32 %v190, 4294901760
      %v533 = vsub.f32 %v190, %v532
      %534 = vmatpush1.msra.mxu0 %v533
      %535 = vmatprep.subr.mxu0 0.0
      %v536 = vand.u32 %v191, 4294901760
      %v537 = vsub.f32 %v191, %v536
      %538 = vmatpush1.msra.mxu0 %v537
      %539 = vmatprep.subr.mxu0 0.0
      %v540 = vand.u32 %v192, 4294901760
      %v541 = vsub.f32 %v192, %v540
      %542 = vmatpush1.msra.mxu0 %v541
      %543 = vmatprep.subr.mxu0 0.0
      %v544 = vand.u32 %v193, 4294901760
      %v545 = vsub.f32 %v193, %v544
      %546 = vmatpush1.msra.mxu0 %v545
      %547 = vmatprep.subr.mxu0 0.0
      %v548 = vand.u32 %v194, 4294901760
      %v549 = vsub.f32 %v194, %v548
      %550 = vmatpush1.msra.mxu0 %v549
      %551 = vmatprep.subr.mxu0 0.0
      %552 = vmatpush1.msra.mxu0 0.0
      %553 = vmatprep.subr.mxu0 0.0
      %554 = vmatpush1.msra.mxu0 0.0
      %555 = vmatprep.subr.mxu0 0.0
      %556 = vmatpush1.msra.mxu0 0.0
      %557 = vmatprep.subr.mxu0 0.0
      %558 = vmatpush1.msra.mxu0 0.0
      %559 = vmatprep.subr.mxu0 0.0
      %560 = vmatpush1.msra.mxu0 0.0
      %561 = vmatprep.subr.mxu0 0.0
      %562 = vmatpush1.msra.mxu0 0.0
      %563 = vmatprep.subr.mxu0 0.0
      %564 = vmatpush1.msra.mxu0 0.0
      %565 = vmatprep.subr.mxu0 0.0
      %566 = vmatpush1.msra.mxu0 0.0
      %567 = vmatprep.subr.mxu0 0.0
      %568 = vmatpush1.msra.mxu0 0.0
      %569 = vmatprep.subr.mxu0 0.0
      %570 = vmatpush1.msra.mxu0 0.0
      %571 = vmatprep.subr.mxu0 0.0
      %572 = vmatpush1.msra.mxu0 0.0
      %573 = vmatprep.subr.mxu0 0.0
      %574 = vmatpush1.msra.mxu0 0.0
      %575 = vmatprep.subr.mxu0 0.0
      %576 = vmatpush1.msra.mxu0 0.0
      %577 = vmatprep.subr.mxu0 0.0
      %578 = vmatpush1.msra.mxu0 0.0
      %579 = vmatprep.subr.mxu0 0.0
      %580 = vmatpush1.msra.mxu0 0.0
      %581 = vmatprep.subr.mxu0 0.0
      %582 = vmatpush1.msra.mxu0 0.0
      %583 = vmatprep.mubr.f32.mxu0 0.0
      %v584 = vand.u32 %v175, 4294901760
      %v585 = vsub.f32 %v175, %v584
      %586 = vmatmul.mubr.f32.gmra.mrb[0].mxu0 %v585
      %v587 = vpop.f32.mrb[0].mxu0
      %v588 = vadd.f32 %v466, %v587
      %v589 = vpop.f32.mrb[0].mxu0
      %590 = vmatprep.mubr.f32.mxu0 0.0
      %v591 = vand.u32 %v176, 4294901760
      %v592 = vsub.f32 %v176, %v591
      %593 = vmatmul.mubr.f32.gmra.mrb[0].mxu0 %v592
      %v594 = vpop.f32.mrb[0].mxu0
      %v595 = vadd.f32 %v472, %v594
      %v596 = vpop.f32.mrb[0].mxu0
      %597 = vmatprep.mubr.f32.mxu0 0.0
      %v598 = vand.u32 %v177, 4294901760
      %v599 = vsub.f32 %v177, %v598
      %600 = vmatmul.mubr.f32.gmra.mrb[0].mxu0 %v599
      %v601 = vpop.f32.mrb[0].mxu0
      %v602 = vadd.f32 %v478, %v601
      %v603 = vpop.f32.mrb[0].mxu0
      %604 = vmatprep.mubr.f32.mxu0 0.0
      %v605 = vand.u32 %v178, 4294901760
      %v606 = vsub.f32 %v178, %v605
      %607 = vmatmul.mubr.f32.gmra.mrb[0].mxu0 %v606
      %v608 = vpop.f32.mrb[0].mxu0
      %v609 = vadd.f32 %v484, %v608
      %v610 = vpop.f32.mrb[0].mxu0
      %611 = vdwg.mxu0
      %612 = vmatprep.subr.mxu0 0.0
      %v613 = vand.u32 %v179, 4294901760
      %614 = vmatpush1.msra.mxu0 %v613
      %615 = vmatprep.subr.mxu0 0.0
      %v616 = vand.u32 %v180, 4294901760
      %617 = vmatpush1.msra.mxu0 %v616
      %618 = vmatprep.subr.mxu0 0.0
      %v619 = vand.u32 %v181, 4294901760
      %620 = vmatpush1.msra.mxu0 %v619
      %621 = vmatprep.subr.mxu0 0.0
      %v622 = vand.u32 %v182, 4294901760
      %623 = vmatpush1.msra.mxu0 %v622
      %624 = vmatprep.subr.mxu0 0.0
      %v625 = vand.u32 %v183, 4294901760
      %626 = vmatpush1.msra.mxu0 %v625
      %627 = vmatprep.subr.mxu0 0.0
      %v628 = vand.u32 %v184, 4294901760
      %629 = vmatpush1.msra.mxu0 %v628
      %630 = vmatprep.subr.mxu0 0.0
      %v631 = vand.u32 %v185, 4294901760
      %632 = vmatpush1.msra.mxu0 %v631
      %633 = vmatprep.subr.mxu0 0.0
      %v634 = vand.u32 %v186, 4294901760
      %635 = vmatpush1.msra.mxu0 %v634
      %636 = vmatprep.subr.mxu0 0.0
      %v637 = vand.u32 %v187, 4294901760
      %638 = vmatpush1.msra.mxu0 %v637
      %639 = vmatprep.subr.mxu0 0.0
      %v640 = vand.u32 %v188, 4294901760
      %641 = vmatpush1.msra.mxu0 %v640
      %642 = vmatprep.subr.mxu0 0.0
      %v643 = vand.u32 %v189, 4294901760
      %644 = vmatpush1.msra.mxu0 %v643
      %645 = vmatprep.subr.mxu0 0.0
      %v646 = vand.u32 %v190, 4294901760
      %647 = vmatpush1.msra.mxu0 %v646
      %648 = vmatprep.subr.mxu0 0.0
      %v649 = vand.u32 %v191, 4294901760
      %650 = vmatpush1.msra.mxu0 %v649
      %651 = vmatprep.subr.mxu0 0.0
      %v652 = vand.u32 %v192, 4294901760
      %653 = vmatpush1.msra.mxu0 %v652
      %654 = vmatprep.subr.mxu0 0.0
      %v655 = vand.u32 %v193, 4294901760
      %656 = vmatpush1.msra.mxu0 %v655
      %657 = vmatprep.subr.mxu0 0.0
      %v658 = vand.u32 %v194, 4294901760
      %659 = vmatpush1.msra.mxu0 %v658
      %660 = vmatprep.subr.mxu0 0.0
      %661 = vmatpush1.msra.mxu0 0.0
      %662 = vmatprep.subr.mxu0 0.0
      %663 = vmatpush1.msra.mxu0 0.0
      %664 = vmatprep.subr.mxu0 0.0
      %665 = vmatpush1.msra.mxu0 0.0
      %666 = vmatprep.subr.mxu0 0.0
      %667 = vmatpush1.msra.mxu0 0.0
      %668 = vmatprep.subr.mxu0 0.0
      %669 = vmatpush1.msra.mxu0 0.0
      %670 = vmatprep.subr.mxu0 0.0
      %671 = vmatpush1.msra.mxu0 0.0
      %672 = vmatprep.subr.mxu0 0.0
      %673 = vmatpush1.msra.mxu0 0.0
      %674 = vmatprep.subr.mxu0 0.0
      %675 = vmatpush1.msra.mxu0 0.0
      %676 = vmatprep.subr.mxu0 0.0
      %677 = vmatpush1.msra.mxu0 0.0
      %678 = vmatprep.subr.mxu0 0.0
      %679 = vmatpush1.msra.mxu0 0.0
      %680 = vmatprep.subr.mxu0 0.0
      %681 = vmatpush1.msra.mxu0 0.0
      %682 = vmatprep.subr.mxu0 0.0
      %683 = vmatpush1.msra.mxu0 0.0
      %684 = vmatprep.subr.mxu0 0.0
      %685 = vmatpush1.msra.mxu0 0.0
      %686 = vmatprep.subr.mxu0 0.0
      %687 = vmatpush1.msra.mxu0 0.0
      %688 = vmatprep.subr.mxu0 0.0
      %689 = vmatpush1.msra.mxu0 0.0
      %690 = vmatprep.subr.mxu0 0.0
      %691 = vmatpush1.msra.mxu0 0.0
      %692 = vmatprep.mubr.f32.mxu0 0.0
      %v693 = vand.u32 %v175, 4294901760
      %v694 = vsub.f32 %v175, %v693
      %v695 = vand.u32 %v694, 4294901760
      %696 = vmatmul.mubr.f32.gmra.mrb[0].mxu0 %v695
      %v697 = vpop.f32.mrb[0].mxu0
      %v698 = vadd.f32 %v588, %v697
      %v699 = vpop.f32.mrb[0].mxu0
      %700 = vmatprep.mubr.f32.mxu0 0.0
      %v701 = vand.u32 %v176, 4294901760
      %v702 = vsub.f32 %v176, %v701
      %v703 = vand.u32 %v702, 4294901760
      %704 = vmatmul.mubr.f32.gmra.mrb[0].mxu0 %v703
      %v705 = vpop.f32.mrb[0].mxu0
      %v706 = vadd.f32 %v595, %v705
      %v707 = vpop.f32.mrb[0].mxu0
      %708 = vmatprep.mubr.f32.mxu0 0.0
      %v709 = vand.u32 %v177, 4294901760
      %v710 = vsub.f32 %v177, %v709
      %v711 = vand.u32 %v710, 4294901760
      %712 = vmatmul.mubr.f32.gmra.mrb[0].mxu0 %v711
      %v713 = vpop.f32.mrb[0].mxu0
      %v714 = vadd.f32 %v602, %v713
      %v715 = vpop.f32.mrb[0].mxu0
      %716 = vmatprep.mubr.f32.mxu0 0.0
      %v717 = vand.u32 %v178, 4294901760
      %v718 = vsub.f32 %v178, %v717
      %v719 = vand.u32 %v718, 4294901760
      %720 = vmatmul.mubr.f32.gmra.mrb[0].mxu0 %v719
      %v721 = vpop.f32.mrb[0].mxu0
      %v722 = vadd.f32 %v609, %v721
      %v723 = vpop.f32.mrb[0].mxu0
      %724 = vdwg.mxu0
      %725 = vmatprep.subr.mxu0 0.0
      %v726 = vand.u32 %v179, 4294901760
      %v727 = vsub.f32 %v179, %v726
      %v728 = vand.u32 %v727, 4294901760
      %729 = vmatpush1.msra.mxu0 %v728
      %730 = vmatprep.subr.mxu0 0.0
      %v731 = vand.u32 %v180, 4294901760
      %v732 = vsub.f32 %v180, %v731
      %v733 = vand.u32 %v732, 4294901760
      %734 = vmatpush1.msra.mxu0 %v733
      %735 = vmatprep.subr.mxu0 0.0
      %v736 = vand.u32 %v181, 4294901760
      %v737 = vsub.f32 %v181, %v736
      %v738 = vand.u32 %v737, 4294901760
      %739 = vmatpush1.msra.mxu0 %v738
      %740 = vmatprep.subr.mxu0 0.0
      %v741 = vand.u32 %v182, 4294901760
      %v742 = vsub.f32 %v182, %v741
      %v743 = vand.u32 %v742, 4294901760
      %744 = vmatpush1.msra.mxu0 %v743
      %745 = vmatprep.subr.mxu0 0.0
      %v746 = vand.u32 %v183, 4294901760
      %v747 = vsub.f32 %v183, %v746
      %v748 = vand.u32 %v747, 4294901760
      %749 = vmatpush1.msra.mxu0 %v748
      %750 = vmatprep.subr.mxu0 0.0
      %v751 = vand.u32 %v184, 4294901760
      %v752 = vsub.f32 %v184, %v751
      %v753 = vand.u32 %v752, 4294901760
      %754 = vmatpush1.msra.mxu0 %v753
      %755 = vmatprep.subr.mxu0 0.0
      %v756 = vand.u32 %v185, 4294901760
      %v757 = vsub.f32 %v185, %v756
      %v758 = vand.u32 %v757, 4294901760
      %759 = vmatpush1.msra.mxu0 %v758
      %760 = vmatprep.subr.mxu0 0.0
      %v761 = vand.u32 %v186, 4294901760
      %v762 = vsub.f32 %v186, %v761
      %v763 = vand.u32 %v762, 4294901760
      %764 = vmatpush1.msra.mxu0 %v763
      %765 = vmatprep.subr.mxu0 0.0
      %v766 = vand.u32 %v187, 4294901760
      %v767 = vsub.f32 %v187, %v766
      %v768 = vand.u32 %v767, 4294901760
      %769 = vmatpush1.msra.mxu0 %v768
      %770 = vmatprep.subr.mxu0 0.0
      %v771 = vand.u32 %v188, 4294901760
      %v772 = vsub.f32 %v188, %v771
      %v773 = vand.u32 %v772, 4294901760
      %774 = vmatpush1.msra.mxu0 %v773
      %775 = vmatprep.subr.mxu0 0.0
      %v776 = vand.u32 %v189, 4294901760
      %v777 = vsub.f32 %v189, %v776
      %v778 = vand.u32 %v777, 4294901760
      %779 = vmatpush1.msra.mxu0 %v778
      %780 = vmatprep.subr.mxu0 0.0
      %v781 = vand.u32 %v190, 4294901760
      %v782 = vsub.f32 %v190, %v781
      %v783 = vand.u32 %v782, 4294901760
      %784 = vmatpush1.msra.mxu0 %v783
      %785 = vmatprep.subr.mxu0 0.0
      %v786 = vand.u32 %v191, 4294901760
      %v787 = vsub.f32 %v191, %v786
      %v788 = vand.u32 %v787, 4294901760
      %789 = vmatpush1.msra.mxu0 %v788
      %790 = vmatprep.subr.mxu0 0.0
      %v791 = vand.u32 %v192, 4294901760
      %v792 = vsub.f32 %v192, %v791
      %v793 = vand.u32 %v792, 4294901760
      %794 = vmatpush1.msra.mxu0 %v793
      %795 = vmatprep.subr.mxu0 0.0
      %v796 = vand.u32 %v193, 4294901760
      %v797 = vsub.f32 %v193, %v796
      %v798 = vand.u32 %v797, 4294901760
      %799 = vmatpush1.msra.mxu0 %v798
      %800 = vmatprep.subr.mxu0 0.0
      %v801 = vand.u32 %v194, 4294901760
      %v802 = vsub.f32 %v194, %v801
      %v803 = vand.u32 %v802, 4294901760
      %804 = vmatpush1.msra.mxu0 %v803
      %805 = vmatprep.subr.mxu0 0.0
      %806 = vmatpush1.msra.mxu0 0.0
      %807 = vmatprep.subr.mxu0 0.0
      %808 = vmatpush1.msra.mxu0 0.0
      %809 = vmatprep.subr.mxu0 0.0
      %810 = vmatpush1.msra.mxu0 0.0
      %811 = vmatprep.subr.mxu0 0.0
      %812 = vmatpush1.msra.mxu0 0.0
      %813 = vmatprep.subr.mxu0 0.0
      %814 = vmatpush1.msra.mxu0 0.0
      %815 = vmatprep.subr.mxu0 0.0
      %816 = vmatpush1.msra.mxu0 0.0
      %817 = vmatprep.subr.mxu0 0.0
      %818 = vmatpush1.msra.mxu0 0.0
      %819 = vmatprep.subr.mxu0 0.0
      %820 = vmatpush1.msra.mxu0 0.0
      %821 = vmatprep.subr.mxu0 0.0
      %822 = vmatpush1.msra.mxu0 0.0
      %823 = vmatprep.subr.mxu0 0.0
      %824 = vmatpush1.msra.mxu0 0.0
      %825 = vmatprep.subr.mxu0 0.0
      %826 = vmatpush1.msra.mxu0 0.0
      %827 = vmatprep.subr.mxu0 0.0
      %828 = vmatpush1.msra.mxu0 0.0
      %829 = vmatprep.subr.mxu0 0.0
      %830 = vmatpush1.msra.mxu0 0.0
      %831 = vmatprep.subr.mxu0 0.0
      %832 = vmatpush1.msra.mxu0 0.0
      %833 = vmatprep.subr.mxu0 0.0
      %834 = vmatpush1.msra.mxu0 0.0
      %835 = vmatprep.subr.mxu0 0.0
      %836 = vmatpush1.msra.mxu0 0.0
      %837 = vmatprep.mubr.f32.mxu0 0.0
      %v838 = vand.u32 %v175, 4294901760
      %839 = vmatmul.mubr.f32.gmra.mrb[0].mxu0 %v838
      %v840 = vpop.f32.mrb[0].mxu0
      %v841 = vadd.f32 %v698, %v840
      %v842 = vpop.f32.mrb[0].mxu0
      %843 = vmatprep.mubr.f32.mxu0 0.0
      %v844 = vand.u32 %v176, 4294901760
      %845 = vmatmul.mubr.f32.gmra.mrb[0].mxu0 %v844
      %v846 = vpop.f32.mrb[0].mxu0
      %v847 = vadd.f32 %v706, %v846
      %v848 = vpop.f32.mrb[0].mxu0
      %849 = vmatprep.mubr.f32.mxu0 0.0
      %v850 = vand.u32 %v177, 4294901760
      %851 = vmatmul.mubr.f32.gmra.mrb[0].mxu0 %v850
      %v852 = vpop.f32.mrb[0].mxu0
      %v853 = vadd.f32 %v714, %v852
      %v854 = vpop.f32.mrb[0].mxu0
      %855 = vmatprep.mubr.f32.mxu0 0.0
      %v856 = vand.u32 %v178, 4294901760
      %857 = vmatmul.mubr.f32.gmra.mrb[0].mxu0 %v856
      %v858 = vpop.f32.mrb[0].mxu0
      %v859 = vadd.f32 %v722, %v858
      %v860 = vpop.f32.mrb[0].mxu0
      %861 = vdwg.mxu0
      %862 = vmatprep.subr.mxu0 0.0
      %v863 = vand.u32 %v179, 4294901760
      %864 = vmatpush1.msra.mxu0 %v863
      %865 = vmatprep.subr.mxu0 0.0
      %v866 = vand.u32 %v180, 4294901760
      %867 = vmatpush1.msra.mxu0 %v866
      %868 = vmatprep.subr.mxu0 0.0
      %v869 = vand.u32 %v181, 4294901760
      %870 = vmatpush1.msra.mxu0 %v869
      %871 = vmatprep.subr.mxu0 0.0
      %v872 = vand.u32 %v182, 4294901760
      %873 = vmatpush1.msra.mxu0 %v872
      %874 = vmatprep.subr.mxu0 0.0
      %v875 = vand.u32 %v183, 4294901760
      %876 = vmatpush1.msra.mxu0 %v875
      %877 = vmatprep.subr.mxu0 0.0
      %v878 = vand.u32 %v184, 4294901760
      %879 = vmatpush1.msra.mxu0 %v878
      %880 = vmatprep.subr.mxu0 0.0
      %v881 = vand.u32 %v185, 4294901760
      %882 = vmatpush1.msra.mxu0 %v881
      %883 = vmatprep.subr.mxu0 0.0
      %v884 = vand.u32 %v186, 4294901760
      %885 = vmatpush1.msra.mxu0 %v884
      %886 = vmatprep.subr.mxu0 0.0
      %v887 = vand.u32 %v187, 4294901760
      %888 = vmatpush1.msra.mxu0 %v887
      %889 = vmatprep.subr.mxu0 0.0
      %v890 = vand.u32 %v188, 4294901760
      %891 = vmatpush1.msra.mxu0 %v890
      %892 = vmatprep.subr.mxu0 0.0
      %v893 = vand.u32 %v189, 4294901760
      %894 = vmatpush1.msra.mxu0 %v893
      %895 = vmatprep.subr.mxu0 0.0
      %v896 = vand.u32 %v190, 4294901760
      %897 = vmatpush1.msra.mxu0 %v896
      %898 = vmatprep.subr.mxu0 0.0
      %v899 = vand.u32 %v191, 4294901760
      %900 = vmatpush1.msra.mxu0 %v899
      %901 = vmatprep.subr.mxu0 0.0
      %v902 = vand.u32 %v192, 4294901760
      %903 = vmatpush1.msra.mxu0 %v902
      %904 = vmatprep.subr.mxu0 0.0
      %v905 = vand.u32 %v193, 4294901760
      %906 = vmatpush1.msra.mxu0 %v905
      %907 = vmatprep.subr.mxu0 0.0
      %v908 = vand.u32 %v194, 4294901760
      %909 = vmatpush1.msra.mxu0 %v908
      %910 = vmatprep.subr.mxu0 0.0
      %911 = vmatpush1.msra.mxu0 0.0
      %912 = vmatprep.subr.mxu0 0.0
      %913 = vmatpush1.msra.mxu0 0.0
      %914 = vmatprep.subr.mxu0 0.0
      %915 = vmatpush1.msra.mxu0 0.0
      %916 = vmatprep.subr.mxu0 0.0
      %917 = vmatpush1.msra.mxu0 0.0
      %918 = vmatprep.subr.mxu0 0.0
      %919 = vmatpush1.msra.mxu0 0.0
      %920 = vmatprep.subr.mxu0 0.0
      %921 = vmatpush1.msra.mxu0 0.0
      %922 = vmatprep.subr.mxu0 0.0
      %923 = vmatpush1.msra.mxu0 0.0
      %924 = vmatprep.subr.mxu0 0.0
      %925 = vmatpush1.msra.mxu0 0.0
      %926 = vmatprep.subr.mxu0 0.0
      %927 = vmatpush1.msra.mxu0 0.0
      %928 = vmatprep.subr.mxu0 0.0
      %929 = vmatpush1.msra.mxu0 0.0
      %930 = vmatprep.subr.mxu0 0.0
      %931 = vmatpush1.msra.mxu0 0.0
      %932 = vmatprep.subr.mxu0 0.0
      %933 = vmatpush1.msra.mxu0 0.0
      %934 = vmatprep.subr.mxu0 0.0
      %935 = vmatpush1.msra.mxu0 0.0
      %936 = vmatprep.subr.mxu0 0.0
      %937 = vmatpush1.msra.mxu0 0.0
      %938 = vmatprep.subr.mxu0 0.0
      %939 = vmatpush1.msra.mxu0 0.0
      %940 = vmatprep.subr.mxu0 0.0
      %941 = vmatpush1.msra.mxu0 0.0
      %942 = vmatprep.mubr.f32.mxu0 0.0
      %v943 = vand.u32 %v175, 4294901760
      %944 = vmatmul.mubr.f32.gmra.mrb[0].mxu0 %v943
      %v945 = vpop.f32.mrb[0].mxu0
      %v946 = vadd.f32 %v841, %v945
      %v947 = vpop.f32.mrb[0].mxu0
      %948 = vmatprep.mubr.f32.mxu0 0.0
      %v949 = vand.u32 %v176, 4294901760
      %950 = vmatmul.mubr.f32.gmra.mrb[0].mxu0 %v949
      %v951 = vpop.f32.mrb[0].mxu0
      %v952 = vadd.f32 %v847, %v951
      %v953 = vpop.f32.mrb[0].mxu0
      %954 = vmatprep.mubr.f32.mxu0 0.0
      %v955 = vand.u32 %v177, 4294901760
      %956 = vmatmul.mubr.f32.gmra.mrb[0].mxu0 %v955
      %v957 = vpop.f32.mrb[0].mxu0
      %v958 = vadd.f32 %v853, %v957
      %v959 = vpop.f32.mrb[0].mxu0
      %960 = vmatprep.mubr.f32.mxu0 0.0
      %v961 = vand.u32 %v178, 4294901760
      %962 = vmatmul.mubr.f32.gmra.mrb[0].mxu0 %v961
      %v963 = vpop.f32.mrb[0].mxu0
      %v964 = vadd.f32 %v859, %v963
      %v965 = vpop.f32.mrb[0].mxu0
      %966 = vdwg.mxu0
      %vm967 = vcmask 31744
      %968 = vst.msk [vmem:[%s173] sm:$0xff] %vm967, %v946
      %969 = vst.msk [vmem:[%s173 + $0x8] sm:$0xff] %vm967, %v952
      %970 = vst.msk [vmem:[%s173 + $0x10] sm:$0xff] %vm967, %v958
      %971 = vst.msk [vmem:[%s173 + $0x18] sm:$0xff] %vm967, %v964
      %s972 = smul.u32 4, %s15
      %p973 = scmp.lt.s32.totalorder %s972, 7
      %s974 = scalar_select %p973, %s972, 7
      %s975 = smul.addr %s974, 8
      %s976 = scalar_lea.vmem %s3, %s975
      // Predicated region
      $region33: #{tpu_custom_call.1} parent=31 // pred_check
        %p977 = pneg %p101
      $region34: #{tpu_custom_call.1} parent=31 // pred_check_branch
        %979 = sbr.rel (%p977) target = $region36
      $region35: #{tpu_custom_call.1} parent=31 // pred_region
        %s980 = smul.u32 4, %s15
      $region36: #{tpu_custom_call.1} parent=31 // pred_fallthru
        _
    $region32: #{tpu_custom_call.1} parent=5 // pred_fallthru
      _
    %p981 = scmp.le.s32.totalorder 2, %s10
    // Predicated region
    $region37: #{tpu_custom_call.1} parent=5 // pred_check
      %p982 = pneg %p981
    $region38: #{tpu_custom_call.1} parent=5 // pred_check_branch
      %984 = sbr.rel (%p982) target = $region40
    $region39: #{tpu_custom_call.1} parent=5 // pred_region
      %s985 = ssub.s32 %s10, 2
      // Predicated region
      $region41: #{tpu_custom_call.1} parent=39 // pred_check
        %p986 = pneg %p107
      $region42: #{tpu_custom_call.1} parent=39 // pred_check_branch
        %988 = sbr.rel (%p986) target = $region44
      $region43: #{tpu_custom_call.1} parent=39 // pred_region
        %s989 = smul.u32 4, %s16
        %p990 = scmp.lt.s32.totalorder %s989, 7
        %s991 = scalar_select %p990, %s989, 7
        %s992 = smul.addr %s991, 8
        %s993 = scalar_lea.vmem %s3, %s992
      $region44: #{tpu_custom_call.1} parent=39 // pred_fallthru
        _
    $region40: #{tpu_custom_call.1} parent=5 // pred_fallthru
      _
  $region6: #{tpu_custom_call.1} parent=0 // loop_footer
    %s14 = sadd.s32 1, %s10
  $region7: #{tpu_custom_call.1} parent=0 // loop_footer_branch
    %9 = sbr.rel target = $region3
  $region8: #{tpu_custom_call.1} parent=0 // loop_exit
    _

</llo_original>
